<compile_context>
chip_gen: v5e
topology: v5e:2x2
jax: 0.10.0
libtpu: 0.0.40
codegen_flags: <defaults>
</compile_context>

<pallas_src>
import jax
import jax.numpy as jnp
from jax.experimental import pallas as pl
from jax.experimental.pallas import tpu as pltpu

# Config (Config.FEATURE_DIM / LSTM_HIDDEN / ACTION_SIZE analogues)
FEATURE_DIM = 16
LSTM_HIDDEN = 32
ACTION_SIZE = 4
MLP_HIDDEN = 64


# ------------------------------------------------------------------ kernel

def rainbow_kernel(x_ref, wlstm_ref, w1_ref, w2_ref, b_ref, out_ref):
    TB, D = x_ref.shape                 # time-major (T*B, D)
    H4 = wlstm_ref.shape[1]             # 4H
    H = H4 // 4
    M3 = w1_ref.shape[1]                # 3 * MLP_HIDDEN
    NOUT = w2_ref.shape[1]              # 1 + 2A  (value | advantage | confidence)
    A = (NOUT - 1) // 2
    B = out_ref.shape[0]
    T = TB // B

    x2d = x_ref[...]                    # (T*B, D)
    w_lstm = wlstm_ref[...]             # (D + H, 4H)
    wih = w_lstm[:D, :]                 # (D, 4H)   sublane-aligned static split (D = 16)
    whh = w_lstm[D:, :]                 # (H, 4H)

    b_all = b_ref[...]                  # (3, 3M)
    lstm_b = b_all[0:1, :H4]            # (1, 4H)
    b1 = b_all[1:2, :M3]                # (1, 3M)
    b2 = b_all[2:3, :NOUT]              # (1, 1+2A)

    # ---- batched input projection: one MXU push for all T timesteps ----
    xw = jnp.dot(x2d, wih, preferred_element_type=jnp.float32) + lstm_b   # (T*B, 4H)

    # ---- LSTM recurrence (statically unrolled, T is small) ----
    # g-gate columns of wih/whh/lstm_b carry a folded x2 scale, so
    # tanh(g) = 2*sigmoid(2g) - 1 and only ONE transcendental (sigmoid of the
    # full (B,4H) vreg) is needed per step on the serial chain.
    h = jnp.zeros((B, H), jnp.float32)
    c = jnp.zeros((B, H), jnp.float32)
    for t in range(T):
        gates = xw[t * B:(t + 1) * B, :] + jnp.dot(
            h, whh, preferred_element_type=jnp.float32)                   # (B, 4H)
        sig = jax.nn.sigmoid(gates)
        i = sig[:, 0 * H:1 * H]
        f = sig[:, 1 * H:2 * H]
        g = 2.0 * sig[:, 2 * H:3 * H] - 1.0        # == tanh(g_raw)
        o = sig[:, 3 * H:4 * H]
        c = f * c + i * g
        h = o * jnp.tanh(c)

    feat = h                                        # (B, H) == lstm_out[:, -1, :]

    # ---- heads: fused first layer (value | advantage | confidence) ----
    h1 = jnp.maximum(
        jnp.dot(feat, w1_ref[...], preferred_element_type=jnp.float32) + b1,
        0.0)                                        # (B, 3M)

    # ---- heads: single block-diagonal second-layer matmul ----
    out2 = jnp.dot(h1, w2_ref[...], preferred_element_type=jnp.float32) + b2   # (B, 1+2A)
    value = out2[:, 0:1]
    adv = out2[:, 1:1 + A]
    conf = jax.nn.sigmoid(out2[:, 1 + A:1 + 2 * A])

    q = value + adv - jnp.mean(adv, axis=1, keepdims=True)                     # (B, A)

    # single lane-dense store; wrapper splits q / conf
    out_ref[...] = jnp.concatenate([q, conf], axis=1)                          # (B, 2A)


# ------------------------------------------------------------------ wrapper

def rainbow_lstm_dqn_forward(x_btd, params):
    """x_btd: (B, T, D) float32, batch_first like the PyTorch module."""
    B, T, D = x_btd.shape
    # time-major (T*B, D): reshape/transpose happens outside the kernel
    x_tbd = jnp.transpose(x_btd, (1, 0, 2)).reshape(T * B, D)

    vmem = pl.BlockSpec(memory_space=pltpu.MemorySpace.VMEM)
    args = (x_tbd, params["w_lstm"], params["w1"], params["w2"], params["b_all"])
    out = pl.pallas_call(
        rainbow_kernel,
        out_shape=jax.ShapeDtypeStruct((B, 2 * ACTION_SIZE), jnp.float32),
        in_specs=[vmem] * len(args),
        out_specs=vmem,
    )(*args)
    q = out[:, :ACTION_SIZE]
    conf = out[:, ACTION_SIZE:]
    return q, conf


# ------------------------------------------------------------ parameter init

def _noisy_eps(key, fan_in, fan_out):
    """Factorized NoisyNet noise, one frozen sample."""
    k_in, k_out = jax.random.split(key)
    f = lambda v: jnp.sign(v) * jnp.sqrt(jnp.abs(v))
    e_in = f(jax.random.normal(k_in, (fan_in,), jnp.float32))
    e_out = f(jax.random.normal(k_out, (fan_out,), jnp.float32))
    return jnp.outer(e_out, e_in), e_out            # (out, in), (out,)


def _linear_params(key, fan_in, fan_out, noisy):
    k_w, k_b, k_e = jax.random.split(key, 3)
    bound = 1.0 / jnp.sqrt(jnp.float32(fan_in))
    w_mu = jax.random.uniform(k_w, (fan_out, fan_in), jnp.float32, -bound, bound)
    b_mu = jax.random.uniform(k_b, (fan_out,), jnp.float32, -bound, bound)
    if noisy:
        sigma = 0.5 / jnp.sqrt(jnp.float32(fan_in))
        w_eps, b_eps = _noisy_eps(k_e, fan_in, fan_out)
        w = w_mu + sigma * w_eps
        b = b_mu + sigma * b_eps
    else:
        w, b = w_mu, b_mu
    # pre-transpose to (in, out); bias as (1, out) row for TPU 2-D layout
    return w.T, b.reshape(1, fan_out)


def init_params(key, input_size=FEATURE_DIM, hidden=LSTM_HIDDEN,
                action_size=ACTION_SIZE):
    keys = jax.random.split(key, 10)
    bound = 1.0 / jnp.sqrt(jnp.float32(hidden))
    w_ih = jax.random.uniform(keys[0], (4 * hidden, input_size), jnp.float32, -bound, bound)
    w_hh = jax.random.uniform(keys[1], (4 * hidden, hidden), jnp.float32, -bound, bound)
    b_ih = jax.random.uniform(keys[2], (4 * hidden,), jnp.float32, -bound, bound)
    b_hh = jax.random.uniform(keys[3], (4 * hidden,), jnp.float32, -bound, bound)

    w_ih_t = w_ih.T                                     # (D, 4H)
    w_hh_t = w_hh.T                                     # (H, 4H)
    lstm_b = (b_ih + b_hh).reshape(1, 4 * hidden)       # (1, 4H)

    # Fold x2 into the g-gate columns [2H:3H] of W_ih, W_hh AND the combined
    # bias so the kernel can use tanh(g) = 2*sigmoid(2g) - 1.
    col = jnp.arange(4 * hidden)
    gscale = jnp.where((col >= 2 * hidden) & (col < 3 * hidden), 2.0, 1.0
                       ).astype(jnp.float32)[None, :]
    w_ih_t = w_ih_t * gscale
    w_hh_t = w_hh_t * gscale
    lstm_b = lstm_b * gscale

    # Pack [W_ih_t ; W_hh_t] into one (D+H, 4H) buffer (D=16 is sublane-aligned).
    w_lstm = jnp.concatenate([w_ih_t, w_hh_t], axis=0)

    wv1, bv1 = _linear_params(keys[4], hidden, MLP_HIDDEN, noisy=True)
    wv2, bv2 = _linear_params(keys[5], MLP_HIDDEN, 1, noisy=True)
    wa1, ba1 = _linear_params(keys[6], hidden, MLP_HIDDEN, noisy=True)
    wa2, ba2 = _linear_params(keys[7], MLP_HIDDEN, action_size, noisy=True)
    wc1, bc1 = _linear_params(keys[8], hidden, MLP_HIDDEN, noisy=False)
    wc2, bc2 = _linear_params(keys[9], MLP_HIDDEN, action_size, noisy=False)

    # fuse the three head first layers: (H, 3M) weights + (1, 3M) bias
    w1cat = jnp.concatenate([wv1, wa1, wc1], axis=1)
    b1cat = jnp.concatenate([bv1, ba1, bc1], axis=1)

    # block-diagonal second-layer weight: (3M, 1 + 2A) -> one MXU push for
    # value | advantage | confidence, landing in adjacent lanes.
    M = MLP_HIDDEN
    nout = 1 + 2 * action_size
    w2bd = jnp.zeros((3 * M, nout), jnp.float32)
    w2bd = w2bd.at[0 * M:1 * M, 0:1].set(wv2)
    w2bd = w2bd.at[1 * M:2 * M, 1:1 + action_size].set(wa2)
    w2bd = w2bd.at[2 * M:3 * M, 1 + action_size:nout].set(wc2)
    b2cat = jnp.concatenate([bv2, ba2, bc2], axis=1)    # (1, 1+2A)

    # single bias buffer: row0 = lstm bias (4H lanes), row1 = b1cat, row2 = b2cat
    b_all = jnp.zeros((3, 3 * M), jnp.float32)
    b_all = b_all.at[0, :4 * hidden].set(lstm_b[0])
    b_all = b_all.at[1, :3 * M].set(b1cat[0])
    b_all = b_all.at[2, :nout].set(b2cat[0])

    return {"w_lstm": w_lstm, "w1": w1cat, "w2": w2bd, "b_all": b_all}


# ---------------------------------------------------------------------- main

if __name__ == "__main__":
    key = jax.random.PRNGKey(0)
    k_x, k_p = jax.random.split(key)

    B, T = 2, 8
    x = jax.random.normal(k_x, (B, T, FEATURE_DIM), jnp.float32)   # (batch, seq, feat)
    params = init_params(k_p)

    q, conf = jax.jit(rainbow_lstm_dqn_forward)(x, params)
    q = jax.block_until_ready(q)
    conf = jax.block_until_ready(conf)

    assert q.shape == (B, ACTION_SIZE) and conf.shape == (B, ACTION_SIZE)
    assert bool(jnp.all(jnp.isfinite(q))) and bool(jnp.all(jnp.isfinite(conf)))
    assert bool(jnp.all((conf >= 0.0) & (conf <= 1.0)))
    print("KERNEL_OK")
</pallas_src>

<mosaic_0001>
module attributes {stable_mosaic.version = 11 : i64} {
  func.func @rainbow_kernel(%arg0: memref<16x16xf32, #tpu.memory_space<vmem>>, %arg1: memref<48x128xf32, #tpu.memory_space<vmem>>, %arg2: memref<32x192xf32, #tpu.memory_space<vmem>>, %arg3: memref<192x9xf32, #tpu.memory_space<vmem>>, %arg4: memref<3x192xf32, #tpu.memory_space<vmem>>, %arg5: memref<2x8xf32, #tpu.memory_space<vmem>>) attributes {dimension_semantics = [], scalar_prefetch = 0 : i64, scratch_operands = 0 : i64, tpu.core_type = #tpu.core_type<tc>} {
    %c0 = arith.constant 0 : index
    %c0_0 = arith.constant 0 : index
    %0 = vector.load %arg0[%c0, %c0_0] : memref<16x16xf32, #tpu.memory_space<vmem>>, vector<16x16xf32>
    %c0_1 = arith.constant 0 : index
    %c0_2 = arith.constant 0 : index
    %1 = vector.load %arg1[%c0_1, %c0_2] : memref<48x128xf32, #tpu.memory_space<vmem>>, vector<48x128xf32>
    %2 = vector.extract_strided_slice %1 {offsets = [0, 0], sizes = [16, 128], strides = [1, 1]} : vector<48x128xf32> to vector<16x128xf32>
    %3 = vector.extract_strided_slice %1 {offsets = [16, 0], sizes = [32, 128], strides = [1, 1]} : vector<48x128xf32> to vector<32x128xf32>
    %c0_3 = arith.constant 0 : index
    %c0_4 = arith.constant 0 : index
    %4 = vector.load %arg4[%c0_3, %c0_4] : memref<3x192xf32, #tpu.memory_space<vmem>>, vector<3x192xf32>
    %5 = vector.extract_strided_slice %4 {offsets = [0, 0], sizes = [1, 128], strides = [1, 1]} : vector<3x192xf32> to vector<1x128xf32>
    %6 = vector.extract_strided_slice %4 {offsets = [1, 0], sizes = [1, 192], strides = [1, 1]} : vector<3x192xf32> to vector<1x192xf32>
    %7 = vector.extract_strided_slice %4 {offsets = [2, 0], sizes = [1, 9], strides = [1, 1]} : vector<3x192xf32> to vector<1x9xf32>
    %cst = arith.constant dense<0.000000e+00> : vector<16x128xf32>
    %8 = tpu.matmul %0, %2, %cst {dimension_numbers = #tpu.dot_dimension_numbers<[1], [0], [0], [1], [0, 0, 1, 1], [], []>} : vector<16x16xf32>, vector<16x128xf32>, vector<16x128xf32> -> vector<16x128xf32>
    %9 = vector.broadcast %5 : vector<1x128xf32> to vector<16x128xf32>
    %10 = arith.addf %8, %9 : vector<16x128xf32>
    %cst_5 = arith.constant 0.000000e+00 : f32
    %11 = vector.broadcast %cst_5 : f32 to vector<2x32xf32>
    %cst_6 = arith.constant 0.000000e+00 : f32
    %12 = vector.broadcast %cst_6 : f32 to vector<2x32xf32>
    %13 = vector.extract_strided_slice %10 {offsets = [0, 0], sizes = [2, 128], strides = [1, 1]} : vector<16x128xf32> to vector<2x128xf32>
    %cst_7 = arith.constant dense<0.000000e+00> : vector<2x128xf32>
    %14 = tpu.matmul %11, %3, %cst_7 {dimension_numbers = #tpu.dot_dimension_numbers<[1], [0], [0], [1], [0, 0, 1, 1], [], []>} : vector<2x32xf32>, vector<32x128xf32>, vector<2x128xf32> -> vector<2x128xf32>
    %15 = arith.addf %13, %14 : vector<2x128xf32>
    %16 = arith.negf %15 : vector<2x128xf32>
    %17 = math.exp %16 : vector<2x128xf32>
    %cst_8 = arith.constant 1.000000e+00 : f32
    %18 = vector.broadcast %cst_8 : f32 to vector<2x128xf32>
    %19 = arith.addf %18, %17 : vector<2x128xf32>
    %20 = arith.divf %18, %19 : vector<2x128xf32>
    %21 = vector.extract_strided_slice %20 {offsets = [0, 0], sizes = [2, 32], strides = [1, 1]} : vector<2x128xf32> to vector<2x32xf32>
    %22 = vector.extract_strided_slice %20 {offsets = [0, 32], sizes = [2, 32], strides = [1, 1]} : vector<2x128xf32> to vector<2x32xf32>
    %23 = vector.extract_strided_slice %20 {offsets = [0, 64], sizes = [2, 32], strides = [1, 1]} : vector<2x128xf32> to vector<2x32xf32>
    %cst_9 = arith.constant 2.000000e+00 : f32
    %24 = vector.broadcast %cst_9 : f32 to vector<2x32xf32>
    %25 = arith.mulf %24, %23 : vector<2x32xf32>
    %cst_10 = arith.constant 1.000000e+00 : f32
    %26 = vector.broadcast %cst_10 : f32 to vector<2x32xf32>
    %27 = arith.subf %25, %26 : vector<2x32xf32>
    %28 = vector.extract_strided_slice %20 {offsets = [0, 96], sizes = [2, 32], strides = [1, 1]} : vector<2x128xf32> to vector<2x32xf32>
    %29 = arith.mulf %22, %12 : vector<2x32xf32>
    %30 = arith.mulf %21, %27 : vector<2x32xf32>
    %31 = arith.addf %29, %30 : vector<2x32xf32>
    %32 = math.tanh %31 : vector<2x32xf32>
    %33 = arith.mulf %28, %32 : vector<2x32xf32>
    %34 = vector.extract_strided_slice %10 {offsets = [2, 0], sizes = [2, 128], strides = [1, 1]} : vector<16x128xf32> to vector<2x128xf32>
    %cst_11 = arith.constant dense<0.000000e+00> : vector<2x128xf32>
    %35 = tpu.matmul %33, %3, %cst_11 {dimension_numbers = #tpu.dot_dimension_numbers<[1], [0], [0], [1], [0, 0, 1, 1], [], []>} : vector<2x32xf32>, vector<32x128xf32>, vector<2x128xf32> -> vector<2x128xf32>
    %36 = arith.addf %34, %35 : vector<2x128xf32>
    %37 = arith.negf %36 : vector<2x128xf32>
    %38 = math.exp %37 : vector<2x128xf32>
    %cst_12 = arith.constant 1.000000e+00 : f32
    %39 = vector.broadcast %cst_12 : f32 to vector<2x128xf32>
    %40 = arith.addf %39, %38 : vector<2x128xf32>
    %41 = arith.divf %39, %40 : vector<2x128xf32>
    %42 = vector.extract_strided_slice %41 {offsets = [0, 0], sizes = [2, 32], strides = [1, 1]} : vector<2x128xf32> to vector<2x32xf32>
    %43 = vector.extract_strided_slice %41 {offsets = [0, 32], sizes = [2, 32], strides = [1, 1]} : vector<2x128xf32> to vector<2x32xf32>
    %44 = vector.extract_strided_slice %41 {offsets = [0, 64], sizes = [2, 32], strides = [1, 1]} : vector<2x128xf32> to vector<2x32xf32>
    %cst_13 = arith.constant 2.000000e+00 : f32
    %45 = vector.broadcast %cst_13 : f32 to vector<2x32xf32>
    %46 = arith.mulf %45, %44 : vector<2x32xf32>
    %cst_14 = arith.constant 1.000000e+00 : f32
    %47 = vector.broadcast %cst_14 : f32 to vector<2x32xf32>
    %48 = arith.subf %46, %47 : vector<2x32xf32>
    %49 = vector.extract_strided_slice %41 {offsets = [0, 96], sizes = [2, 32], strides = [1, 1]} : vector<2x128xf32> to vector<2x32xf32>
    %50 = arith.mulf %43, %31 : vector<2x32xf32>
    %51 = arith.mulf %42, %48 : vector<2x32xf32>
    %52 = arith.addf %50, %51 : vector<2x32xf32>
    %53 = math.tanh %52 : vector<2x32xf32>
    %54 = arith.mulf %49, %53 : vector<2x32xf32>
    %55 = vector.extract_strided_slice %10 {offsets = [4, 0], sizes = [2, 128], strides = [1, 1]} : vector<16x128xf32> to vector<2x128xf32>
    %cst_15 = arith.constant dense<0.000000e+00> : vector<2x128xf32>
    %56 = tpu.matmul %54, %3, %cst_15 {dimension_numbers = #tpu.dot_dimension_numbers<[1], [0], [0], [1], [0, 0, 1, 1], [], []>} : vector<2x32xf32>, vector<32x128xf32>, vector<2x128xf32> -> vector<2x128xf32>
    %57 = arith.addf %55, %56 : vector<2x128xf32>
    %58 = arith.negf %57 : vector<2x128xf32>
    %59 = math.exp %58 : vector<2x128xf32>
    %cst_16 = arith.constant 1.000000e+00 : f32
    %60 = vector.broadcast %cst_16 : f32 to vector<2x128xf32>
    %61 = arith.addf %60, %59 : vector<2x128xf32>
    %62 = arith.divf %60, %61 : vector<2x128xf32>
    %63 = vector.extract_strided_slice %62 {offsets = [0, 0], sizes = [2, 32], strides = [1, 1]} : vector<2x128xf32> to vector<2x32xf32>
    %64 = vector.extract_strided_slice %62 {offsets = [0, 32], sizes = [2, 32], strides = [1, 1]} : vector<2x128xf32> to vector<2x32xf32>
    %65 = vector.extract_strided_slice %62 {offsets = [0, 64], sizes = [2, 32], strides = [1, 1]} : vector<2x128xf32> to vector<2x32xf32>
    %cst_17 = arith.constant 2.000000e+00 : f32
    %66 = vector.broadcast %cst_17 : f32 to vector<2x32xf32>
    %67 = arith.mulf %66, %65 : vector<2x32xf32>
    %cst_18 = arith.constant 1.000000e+00 : f32
    %68 = vector.broadcast %cst_18 : f32 to vector<2x32xf32>
    %69 = arith.subf %67, %68 : vector<2x32xf32>
    %70 = vector.extract_strided_slice %62 {offsets = [0, 96], sizes = [2, 32], strides = [1, 1]} : vector<2x128xf32> to vector<2x32xf32>
    %71 = arith.mulf %64, %52 : vector<2x32xf32>
    %72 = arith.mulf %63, %69 : vector<2x32xf32>
    %73 = arith.addf %71, %72 : vector<2x32xf32>
    %74 = math.tanh %73 : vector<2x32xf32>
    %75 = arith.mulf %70, %74 : vector<2x32xf32>
    %76 = vector.extract_strided_slice %10 {offsets = [6, 0], sizes = [2, 128], strides = [1, 1]} : vector<16x128xf32> to vector<2x128xf32>
    %cst_19 = arith.constant dense<0.000000e+00> : vector<2x128xf32>
    %77 = tpu.matmul %75, %3, %cst_19 {dimension_numbers = #tpu.dot_dimension_numbers<[1], [0], [0], [1], [0, 0, 1, 1], [], []>} : vector<2x32xf32>, vector<32x128xf32>, vector<2x128xf32> -> vector<2x128xf32>
    %78 = arith.addf %76, %77 : vector<2x128xf32>
    %79 = arith.negf %78 : vector<2x128xf32>
    %80 = math.exp %79 : vector<2x128xf32>
    %cst_20 = arith.constant 1.000000e+00 : f32
    %81 = vector.broadcast %cst_20 : f32 to vector<2x128xf32>
    %82 = arith.addf %81, %80 : vector<2x128xf32>
    %83 = arith.divf %81, %82 : vector<2x128xf32>
    %84 = vector.extract_strided_slice %83 {offsets = [0, 0], sizes = [2, 32], strides = [1, 1]} : vector<2x128xf32> to vector<2x32xf32>
    %85 = vector.extract_strided_slice %83 {offsets = [0, 32], sizes = [2, 32], strides = [1, 1]} : vector<2x128xf32> to vector<2x32xf32>
    %86 = vector.extract_strided_slice %83 {offsets = [0, 64], sizes = [2, 32], strides = [1, 1]} : vector<2x128xf32> to vector<2x32xf32>
    %cst_21 = arith.constant 2.000000e+00 : f32
    %87 = vector.broadcast %cst_21 : f32 to vector<2x32xf32>
    %88 = arith.mulf %87, %86 : vector<2x32xf32>
    %cst_22 = arith.constant 1.000000e+00 : f32
    %89 = vector.broadcast %cst_22 : f32 to vector<2x32xf32>
    %90 = arith.subf %88, %89 : vector<2x32xf32>
    %91 = vector.extract_strided_slice %83 {offsets = [0, 96], sizes = [2, 32], strides = [1, 1]} : vector<2x128xf32> to vector<2x32xf32>
    %92 = arith.mulf %85, %73 : vector<2x32xf32>
    %93 = arith.mulf %84, %90 : vector<2x32xf32>
    %94 = arith.addf %92, %93 : vector<2x32xf32>
    %95 = math.tanh %94 : vector<2x32xf32>
    %96 = arith.mulf %91, %95 : vector<2x32xf32>
    %97 = vector.extract_strided_slice %10 {offsets = [8, 0], sizes = [2, 128], strides = [1, 1]} : vector<16x128xf32> to vector<2x128xf32>
    %cst_23 = arith.constant dense<0.000000e+00> : vector<2x128xf32>
    %98 = tpu.matmul %96, %3, %cst_23 {dimension_numbers = #tpu.dot_dimension_numbers<[1], [0], [0], [1], [0, 0, 1, 1], [], []>} : vector<2x32xf32>, vector<32x128xf32>, vector<2x128xf32> -> vector<2x128xf32>
    %99 = arith.addf %97, %98 : vector<2x128xf32>
    %100 = arith.negf %99 : vector<2x128xf32>
    %101 = math.exp %100 : vector<2x128xf32>
    %cst_24 = arith.constant 1.000000e+00 : f32
    %102 = vector.broadcast %cst_24 : f32 to vector<2x128xf32>
    %103 = arith.addf %102, %101 : vector<2x128xf32>
    %104 = arith.divf %102, %103 : vector<2x128xf32>
    %105 = vector.extract_strided_slice %104 {offsets = [0, 0], sizes = [2, 32], strides = [1, 1]} : vector<2x128xf32> to vector<2x32xf32>
    %106 = vector.extract_strided_slice %104 {offsets = [0, 32], sizes = [2, 32], strides = [1, 1]} : vector<2x128xf32> to vector<2x32xf32>
    %107 = vector.extract_strided_slice %104 {offsets = [0, 64], sizes = [2, 32], strides = [1, 1]} : vector<2x128xf32> to vector<2x32xf32>
    %cst_25 = arith.constant 2.000000e+00 : f32
    %108 = vector.broadcast %cst_25 : f32 to vector<2x32xf32>
    %109 = arith.mulf %108, %107 : vector<2x32xf32>
    %cst_26 = arith.constant 1.000000e+00 : f32
    %110 = vector.broadcast %cst_26 : f32 to vector<2x32xf32>
    %111 = arith.subf %109, %110 : vector<2x32xf32>
    %112 = vector.extract_strided_slice %104 {offsets = [0, 96], sizes = [2, 32], strides = [1, 1]} : vector<2x128xf32> to vector<2x32xf32>
    %113 = arith.mulf %106, %94 : vector<2x32xf32>
    %114 = arith.mulf %105, %111 : vector<2x32xf32>
    %115 = arith.addf %113, %114 : vector<2x32xf32>
    %116 = math.tanh %115 : vector<2x32xf32>
    %117 = arith.mulf %112, %116 : vector<2x32xf32>
    %118 = vector.extract_strided_slice %10 {offsets = [10, 0], sizes = [2, 128], strides = [1, 1]} : vector<16x128xf32> to vector<2x128xf32>
    %cst_27 = arith.constant dense<0.000000e+00> : vector<2x128xf32>
    %119 = tpu.matmul %117, %3, %cst_27 {dimension_numbers = #tpu.dot_dimension_numbers<[1], [0], [0], [1], [0, 0, 1, 1], [], []>} : vector<2x32xf32>, vector<32x128xf32>, vector<2x128xf32> -> vector<2x128xf32>
    %120 = arith.addf %118, %119 : vector<2x128xf32>
    %121 = arith.negf %120 : vector<2x128xf32>
    %122 = math.exp %121 : vector<2x128xf32>
    %cst_28 = arith.constant 1.000000e+00 : f32
    %123 = vector.broadcast %cst_28 : f32 to vector<2x128xf32>
    %124 = arith.addf %123, %122 : vector<2x128xf32>
    %125 = arith.divf %123, %124 : vector<2x128xf32>
    %126 = vector.extract_strided_slice %125 {offsets = [0, 0], sizes = [2, 32], strides = [1, 1]} : vector<2x128xf32> to vector<2x32xf32>
    %127 = vector.extract_strided_slice %125 {offsets = [0, 32], sizes = [2, 32], strides = [1, 1]} : vector<2x128xf32> to vector<2x32xf32>
    %128 = vector.extract_strided_slice %125 {offsets = [0, 64], sizes = [2, 32], strides = [1, 1]} : vector<2x128xf32> to vector<2x32xf32>
    %cst_29 = arith.constant 2.000000e+00 : f32
    %129 = vector.broadcast %cst_29 : f32 to vector<2x32xf32>
    %130 = arith.mulf %129, %128 : vector<2x32xf32>
    %cst_30 = arith.constant 1.000000e+00 : f32
    %131 = vector.broadcast %cst_30 : f32 to vector<2x32xf32>
    %132 = arith.subf %130, %131 : vector<2x32xf32>
    %133 = vector.extract_strided_slice %125 {offsets = [0, 96], sizes = [2, 32], strides = [1, 1]} : vector<2x128xf32> to vector<2x32xf32>
    %134 = arith.mulf %127, %115 : vector<2x32xf32>
    %135 = arith.mulf %126, %132 : vector<2x32xf32>
    %136 = arith.addf %134, %135 : vector<2x32xf32>
    %137 = math.tanh %136 : vector<2x32xf32>
    %138 = arith.mulf %133, %137 : vector<2x32xf32>
    %139 = vector.extract_strided_slice %10 {offsets = [12, 0], sizes = [2, 128], strides = [1, 1]} : vector<16x128xf32> to vector<2x128xf32>
    %cst_31 = arith.constant dense<0.000000e+00> : vector<2x128xf32>
    %140 = tpu.matmul %138, %3, %cst_31 {dimension_numbers = #tpu.dot_dimension_numbers<[1], [0], [0], [1], [0, 0, 1, 1], [], []>} : vector<2x32xf32>, vector<32x128xf32>, vector<2x128xf32> -> vector<2x128xf32>
    %141 = arith.addf %139, %140 : vector<2x128xf32>
    %142 = arith.negf %141 : vector<2x128xf32>
    %143 = math.exp %142 : vector<2x128xf32>
    %cst_32 = arith.constant 1.000000e+00 : f32
    %144 = vector.broadcast %cst_32 : f32 to vector<2x128xf32>
    %145 = arith.addf %144, %143 : vector<2x128xf32>
    %146 = arith.divf %144, %145 : vector<2x128xf32>
    %147 = vector.extract_strided_slice %146 {offsets = [0, 0], sizes = [2, 32], strides = [1, 1]} : vector<2x128xf32> to vector<2x32xf32>
    %148 = vector.extract_strided_slice %146 {offsets = [0, 32], sizes = [2, 32], strides = [1, 1]} : vector<2x128xf32> to vector<2x32xf32>
    %149 = vector.extract_strided_slice %146 {offsets = [0, 64], sizes = [2, 32], strides = [1, 1]} : vector<2x128xf32> to vector<2x32xf32>
    %cst_33 = arith.constant 2.000000e+00 : f32
    %150 = vector.broadcast %cst_33 : f32 to vector<2x32xf32>
    %151 = arith.mulf %150, %149 : vector<2x32xf32>
    %cst_34 = arith.constant 1.000000e+00 : f32
    %152 = vector.broadcast %cst_34 : f32 to vector<2x32xf32>
    %153 = arith.subf %151, %152 : vector<2x32xf32>
    %154 = vector.extract_strided_slice %146 {offsets = [0, 96], sizes = [2, 32], strides = [1, 1]} : vector<2x128xf32> to vector<2x32xf32>
    %155 = arith.mulf %148, %136 : vector<2x32xf32>
    %156 = arith.mulf %147, %153 : vector<2x32xf32>
    %157 = arith.addf %155, %156 : vector<2x32xf32>
    %158 = math.tanh %157 : vector<2x32xf32>
    %159 = arith.mulf %154, %158 : vector<2x32xf32>
    %160 = vector.extract_strided_slice %10 {offsets = [14, 0], sizes = [2, 128], strides = [1, 1]} : vector<16x128xf32> to vector<2x128xf32>
    %cst_35 = arith.constant dense<0.000000e+00> : vector<2x128xf32>
    %161 = tpu.matmul %159, %3, %cst_35 {dimension_numbers = #tpu.dot_dimension_numbers<[1], [0], [0], [1], [0, 0, 1, 1], [], []>} : vector<2x32xf32>, vector<32x128xf32>, vector<2x128xf32> -> vector<2x128xf32>
    %162 = arith.addf %160, %161 : vector<2x128xf32>
    %163 = arith.negf %162 : vector<2x128xf32>
    %164 = math.exp %163 : vector<2x128xf32>
    %cst_36 = arith.constant 1.000000e+00 : f32
    %165 = vector.broadcast %cst_36 : f32 to vector<2x128xf32>
    %166 = arith.addf %165, %164 : vector<2x128xf32>
    %167 = arith.divf %165, %166 : vector<2x128xf32>
    %168 = vector.extract_strided_slice %167 {offsets = [0, 0], sizes = [2, 32], strides = [1, 1]} : vector<2x128xf32> to vector<2x32xf32>
    %169 = vector.extract_strided_slice %167 {offsets = [0, 32], sizes = [2, 32], strides = [1, 1]} : vector<2x128xf32> to vector<2x32xf32>
    %170 = vector.extract_strided_slice %167 {offsets = [0, 64], sizes = [2, 32], strides = [1, 1]} : vector<2x128xf32> to vector<2x32xf32>
    %cst_37 = arith.constant 2.000000e+00 : f32
    %171 = vector.broadcast %cst_37 : f32 to vector<2x32xf32>
    %172 = arith.mulf %171, %170 : vector<2x32xf32>
    %cst_38 = arith.constant 1.000000e+00 : f32
    %173 = vector.broadcast %cst_38 : f32 to vector<2x32xf32>
    %174 = arith.subf %172, %173 : vector<2x32xf32>
    %175 = vector.extract_strided_slice %167 {offsets = [0, 96], sizes = [2, 32], strides = [1, 1]} : vector<2x128xf32> to vector<2x32xf32>
    %176 = arith.mulf %169, %157 : vector<2x32xf32>
    %177 = arith.mulf %168, %174 : vector<2x32xf32>
    %178 = arith.addf %176, %177 : vector<2x32xf32>
    %179 = math.tanh %178 : vector<2x32xf32>
    %180 = arith.mulf %175, %179 : vector<2x32xf32>
    %c0_39 = arith.constant 0 : index
    %c0_40 = arith.constant 0 : index
    %181 = vector.load %arg2[%c0_39, %c0_40] : memref<32x192xf32, #tpu.memory_space<vmem>>, vector<32x192xf32>
    %cst_41 = arith.constant dense<0.000000e+00> : vector<2x192xf32>
    %182 = tpu.matmul %180, %181, %cst_41 {dimension_numbers = #tpu.dot_dimension_numbers<[1], [0], [0], [1], [0, 0, 1, 1], [], []>} : vector<2x32xf32>, vector<32x192xf32>, vector<2x192xf32> -> vector<2x192xf32>
    %183 = vector.broadcast %6 : vector<1x192xf32> to vector<2x192xf32>
    %184 = arith.addf %182, %183 : vector<2x192xf32>
    %cst_42 = arith.constant 0.000000e+00 : f32
    %185 = vector.broadcast %cst_42 : f32 to vector<2x192xf32>
    %186 = arith.maximumf %184, %185 : vector<2x192xf32>
    %c0_43 = arith.constant 0 : index
    %c0_44 = arith.constant 0 : index
    %187 = vector.load %arg3[%c0_43, %c0_44] : memref<192x9xf32, #tpu.memory_space<vmem>>, vector<192x9xf32>
    %cst_45 = arith.constant dense<0.000000e+00> : vector<2x9xf32>
    %188 = tpu.matmul %186, %187, %cst_45 {dimension_numbers = #tpu.dot_dimension_numbers<[1], [0], [0], [1], [0, 0, 1, 1], [], []>} : vector<2x192xf32>, vector<192x9xf32>, vector<2x9xf32> -> vector<2x9xf32>
    %189 = vector.broadcast %7 : vector<1x9xf32> to vector<2x9xf32>
    %190 = arith.addf %188, %189 : vector<2x9xf32>
    %191 = vector.extract_strided_slice %190 {offsets = [0, 0], sizes = [2, 1], strides = [1, 1]} : vector<2x9xf32> to vector<2x1xf32>
    %192 = vector.extract_strided_slice %190 {offsets = [0, 1], sizes = [2, 4], strides = [1, 1]} : vector<2x9xf32> to vector<2x4xf32>
    %193 = vector.extract_strided_slice %190 {offsets = [0, 5], sizes = [2, 4], strides = [1, 1]} : vector<2x9xf32> to vector<2x4xf32>
    %194 = arith.negf %193 : vector<2x4xf32>
    %195 = math.exp %194 : vector<2x4xf32>
    %cst_46 = arith.constant 1.000000e+00 : f32
    %196 = vector.broadcast %cst_46 : f32 to vector<2x4xf32>
    %197 = arith.addf %196, %195 : vector<2x4xf32>
    %198 = arith.divf %196, %197 : vector<2x4xf32>
    %199 = vector.broadcast %191 : vector<2x1xf32> to vector<2x4xf32>
    %200 = arith.addf %199, %192 : vector<2x4xf32>
    %cst_47 = arith.constant dense<0.000000e+00> : vector<2xf32>
    %201 = vector.multi_reduction <add>, %192, %cst_47 [1] : vector<2x4xf32> to vector<2xf32>
    %202 = vector.shape_cast %201 : vector<2xf32> to vector<2x1xf32>
    %cst_48 = arith.constant 4.000000e+00 : f32
    %203 = vector.broadcast %cst_48 : f32 to vector<2x1xf32>
    %204 = arith.divf %202, %203 : vector<2x1xf32>
    %205 = vector.broadcast %204 : vector<2x1xf32> to vector<2x4xf32>
    %206 = arith.subf %200, %205 : vector<2x4xf32>
    %207 = tpu.concatenate %206, %198 in 1 : vector<2x4xf32>, vector<2x4xf32> -> vector<2x8xf32>
    %c0_49 = arith.constant 0 : index
    %c0_50 = arith.constant 0 : index
    %208 = vector.load %arg5[%c0_49, %c0_50] : memref<2x8xf32, #tpu.memory_space<vmem>>, vector<2x8xf32>
    tpu.vector_store %arg5[%c0_49, %c0_50], %207 {strides = array<i32>} : memref<2x8xf32, #tpu.memory_space<vmem>>, vector<2x8xf32>,
    return
  }
}

</mosaic_0001>

<llo_original>
// kernel: rainbow_lstm_dqn_forward.1
$region0: #{rainbow_lstm_dqn_forward.1}
  #allocation0 [shape = 'u32[]', space=smem, size = 0x4, offset = 0x4, fixed_abs, tag = 'smem constant byte address 0x4 - core index']
  #allocation1 [shape = 'u32[72,128]{1,0:T(1,128)}', space=vmem, size = 0x9000, scoped, tag = 'internal scratch']
  %s0 = inlined_call_operand.vmem [shape: f32[16,16], index: 0, kind: input, shape index: {}]
  %s1 = inlined_call_operand.vmem [shape: f32[48,128], index: 1, kind: input, shape index: {}]
  %s2 = inlined_call_operand.vmem [shape: f32[32,192], index: 2, kind: input, shape index: {}]
  %s3 = inlined_call_operand.vmem [shape: f32[192,9], index: 3, kind: input, shape index: {}]
  %s4 = inlined_call_operand.vmem [shape: f32[3,192], index: 4, kind: input, shape index: {}]
  %s5 = inlined_call_operand.vmem [shape: f32[2,8], index: 5, kind: output, shape index: {}]
  %s6 = sld [smem:[#allocation0]]
  $region30: #{rainbow_lstm_dqn_forward.1} parent=0
    _
  %s8 = ssub.s32 1, %s6
  %s9 = scalar_select 0, %s8, %s6
  // Predicated region
  $region2: #{rainbow_lstm_dqn_forward.1} parent=0 // pred_check
    _
  $region3: #{rainbow_lstm_dqn_forward.1} parent=0 // pred_check_branch
    %11 = sbr.rel (0) target = $region5
  $region4: #{rainbow_lstm_dqn_forward.1} parent=0 // pred_region
    _
  $region5: #{rainbow_lstm_dqn_forward.1} parent=0 // pred_fallthru
    _
  // Predicated region
  $region6: #{rainbow_lstm_dqn_forward.1} parent=0 // pred_check
    _
  $region7: #{rainbow_lstm_dqn_forward.1} parent=0 // pred_check_branch
    %13 = sbr.rel (0) target = $region9
  $region8: #{rainbow_lstm_dqn_forward.1} parent=0 // pred_region
    _
  $region9: #{rainbow_lstm_dqn_forward.1} parent=0 // pred_fallthru
    _
  // Predicated region
  $region10: #{rainbow_lstm_dqn_forward.1} parent=0 // pred_check
    _
  $region11: #{rainbow_lstm_dqn_forward.1} parent=0 // pred_check_branch
    %15 = sbr.rel (0) target = $region13
  $region12: #{rainbow_lstm_dqn_forward.1} parent=0 // pred_region
    _
  $region13: #{rainbow_lstm_dqn_forward.1} parent=0 // pred_fallthru
    _
  // Predicated region
  $region14: #{rainbow_lstm_dqn_forward.1} parent=0 // pred_check
    _
  $region15: #{rainbow_lstm_dqn_forward.1} parent=0 // pred_check_branch
    %17 = sbr.rel (0) target = $region17
  $region16: #{rainbow_lstm_dqn_forward.1} parent=0 // pred_region
    _
  $region17: #{rainbow_lstm_dqn_forward.1} parent=0 // pred_fallthru
    _
  // Predicated region
  $region18: #{rainbow_lstm_dqn_forward.1} parent=0 // pred_check
    _
  $region19: #{rainbow_lstm_dqn_forward.1} parent=0 // pred_check_branch
    %19 = sbr.rel (0) target = $region21
  $region20: #{rainbow_lstm_dqn_forward.1} parent=0 // pred_region
    _
  $region21: #{rainbow_lstm_dqn_forward.1} parent=0 // pred_fallthru
    _
  %v20 = vld [vmem:[%s0] sm:$0xff]
  %v21 = vld [vmem:[%s0 + $0x8] sm:$0xff]
  %v22 = vld [vmem:[%s1] sm:$0xff]
  %v23 = vld [vmem:[%s1 + $0x8] sm:$0xff]
  %v24 = vld [vmem:[%s1 + $0x10] sm:$0xff]
  %v25 = vld [vmem:[%s1 + $0x18] sm:$0xff]
  %v26 = vld [vmem:[%s1 + $0x20] sm:$0xff]
  %v27 = vld [vmem:[%s1 + $0x28] sm:$0xff]
  %v28 = vld [vmem:[%s4] sm:$0x77]
  %v29 = vperm.slane %v28, 0
  %vm30 = vcmask 130048
  %v32 = vsel %vm30, %v20, 0
  %v35 = vsel %vm30, %v21, 0
  %37 = vmatpush.msra.mxu0 0.0
  %38 = vmatpush.msra.mxu0 0.0
  %39 = vmatpush.msra.mxu0 0.0
  %40 = vmatpush.msra.mxu0 0.0
  %41 = vmatpush.msra.mxu0 0.0
  %42 = vmatpush.msra.mxu0 0.0
  %43 = vmatpush.msra.mxu0 0.0
  %44 = vmatpush.msra.mxu0 0.0
  %45 = vmatpush.msra.mxu0 0.0
  %46 = vmatpush.msra.mxu0 0.0
  %47 = vmatpush.msra.mxu0 0.0
  %48 = vmatpush.msra.mxu0 0.0
  %49 = vmatpush.msra.mxu0 0.0
  %50 = vmatpush.msra.mxu0 0.0
  %51 = vmatpush.msra.mxu0 %v23
  %52 = vmatpush.msra.mxu0 %v22
  %53 = vmatmul.f32.gmra.mxu0 %v32
  %v54 = vpop.f32.mrf.mxu0
  %v55 = vadd.f32 %v29, %v54
  %56 = vmatmul.f32.gmra.mxu0 %v35
  %v57 = vpop.f32.mrf.mxu0
  %v58 = vadd.f32 %v29, %v57
  %59 = vdwg.mxu0
  %vm60 = vcmask 261120
  %v62 = vsel %vm60, 0.0, 0
  %64 = vmatpush.msra.mxu0 0.0
  %65 = vmatpush.msra.mxu0 0.0
  %66 = vmatpush.msra.mxu0 0.0
  %67 = vmatpush.msra.mxu0 0.0
  %68 = vmatpush.msra.mxu0 0.0
  %69 = vmatpush.msra.mxu0 0.0
  %70 = vmatpush.msra.mxu0 0.0
  %71 = vmatpush.msra.mxu0 0.0
  %72 = vmatpush.msra.mxu0 0.0
  %73 = vmatpush.msra.mxu0 0.0
  %74 = vmatpush.msra.mxu0 0.0
  %75 = vmatpush.msra.mxu0 0.0
  %76 = vmatpush.msra.mxu0 %v27
  %77 = vmatpush.msra.mxu0 %v26
  %78 = vmatpush.msra.mxu0 %v25
  %79 = vmatpush.msra.mxu0 %v24
  %80 = vmatmul.f32.gmra.mxu0 %v62
  %v81 = vpop.f32.mrf.mxu0
  %v82 = vadd.f32 0.0, %v81
  %83 = vdwg.mxu0
  %v84 = vadd.f32 %v55, %v82
  %v85 = vxor.u32 %v84, 2147483648
  %v86 = vmul.f32 %v85, 1.442695
  %v87 = vpow.pop %v86
  %v88 = vadd.f32 %v87, 1.0
  %v89 = vrcp.pop %v88
  %v90 = vmul.f32 %v88, %v89
  %v91 = vsub.f32 1.0, %v90
  %v92 = vmul.f32 %v89, %v91
  %v93 = vadd.f32 %v89, %v92
  %vm94 = vweird.f32 %v88
  %vm95 = vweird.f32 %v89
  %vm96 = vmor %vm94, %vm95
  %v97 = vsel %vm96, %v89, %v93
  %v98 = vand.u32 2147483647, %v88
  %vm99 = vcmp.eq.f32.partialorder %v98, 8.507059e+37
  %v100 = vand.u32 %v88, 2147483648
  %v101 = vor.u32 1.1754944e-38, %v100
  %v102 = vsel %vm99, %v101, %v97
  %v103 = vmul.f32 1.0, %v102
  %v104 = vmul.f32 %v103, 2.0
  %v105 = vsub.f32 %v104, 1.0
  %v106 = vmul.f32 %v103, 0.0
  %108 = vrot.lane.b32.xlu0 %v105, 64
  %v109 = vpop.permute.xlu0 %108
  %v111 = vmul.f32 %v103, %v109
  %113 = vrot.lane.b32.xlu0 %v111, 32
  %v114 = vpop.permute.xlu0 %113
  %v116 = vadd.f32 %v106, %v114
  %v117 = vtanh.pop %v116
  %119 = vrot.lane.b32.xlu0 %v117, 64
  %v120 = vpop.permute.xlu0 %119
  %v122 = vmul.f32 %v103, %v120
  %124 = vrot.lane.b32.xlu0 %v122, 32
  %v125 = vpop.permute.xlu0 %124
  %v126 = vsel %vm60, %v125, 0
  %128 = vmatpush.msra.mxu0 0.0
  %129 = vmatpush.msra.mxu0 0.0
  %130 = vmatpush.msra.mxu0 0.0
  %131 = vmatpush.msra.mxu0 0.0
  %132 = vmatpush.msra.mxu0 0.0
  %133 = vmatpush.msra.mxu0 0.0
  %134 = vmatpush.msra.mxu0 0.0
  %135 = vmatpush.msra.mxu0 0.0
  %136 = vmatpush.msra.mxu0 0.0
  %137 = vmatpush.msra.mxu0 0.0
  %138 = vmatpush.msra.mxu0 0.0
  %139 = vmatpush.msra.mxu0 0.0
  %140 = vmatpush.msra.mxu0 %v27
  %141 = vmatpush.msra.mxu0 %v26
  %142 = vmatpush.msra.mxu0 %v25
  %143 = vmatpush.msra.mxu0 %v24
  %144 = vmatmul.f32.gmra.mxu0 %v126
  %v145 = vpop.f32.mrf.mxu0
  %v146 = vadd.f32 0.0, %v145
  %147 = vdwg.mxu0
  %v149 = vrot.slane %v146, 6
  %v151 = vadd.f32 %v55, %v149
  %v152 = vxor.u32 %v151, 2147483648
  %v153 = vmul.f32 %v152, 1.442695
  %v154 = vpow.pop %v153
  %v155 = vadd.f32 %v154, 1.0
  %v156 = vrcp.pop %v155
  %v157 = vmul.f32 %v155, %v156
  %v158 = vsub.f32 1.0, %v157
  %v159 = vmul.f32 %v156, %v158
  %v160 = vadd.f32 %v156, %v159
  %vm161 = vweird.f32 %v155
  %vm162 = vweird.f32 %v156
  %vm163 = vmor %vm161, %vm162
  %v164 = vsel %vm163, %v156, %v160
  %v165 = vand.u32 2147483647, %v155
  %vm166 = vcmp.eq.f32.partialorder %v165, 8.507059e+37
  %v167 = vand.u32 %v155, 2147483648
  %v168 = vor.u32 1.1754944e-38, %v167
  %v169 = vsel %vm166, %v168, %v164
  %v170 = vmul.f32 1.0, %v169
  %v171 = vmul.f32 %v170, 2.0
  %v172 = vsub.f32 %v171, 1.0
  %v174 = vrot.slane %v116, 6
  %v176 = vmul.f32 %v170, %v174
  %178 = vrot.lane.b32.xlu0 %v172, 64
  %v179 = vpop.permute.xlu0 %178
  %v181 = vmul.f32 %v170, %v179
  %183 = vrot.lane.b32.xlu0 %v181, 32
  %v184 = vpop.permute.xlu0 %183
  %v186 = vadd.f32 %v176, %v184
  %v187 = vtanh.pop %v186
  %189 = vrot.lane.b32.xlu0 %v187, 64
  %v190 = vpop.permute.xlu0 %189
  %v192 = vmul.f32 %v170, %v190
  %v194 = vrot.slane %v192, 2
  %195 = vrot.lane.b32.xlu0 %v194, 32
  %v196 = vpop.permute.xlu0 %195
  %v197 = vsel %vm60, %v196, 0
  %199 = vmatpush.msra.mxu0 0.0
  %200 = vmatpush.msra.mxu0 0.0
  %201 = vmatpush.msra.mxu0 0.0
  %202 = vmatpush.msra.mxu0 0.0
  %203 = vmatpush.msra.mxu0 0.0
  %204 = vmatpush.msra.mxu0 0.0
  %205 = vmatpush.msra.mxu0 0.0
  %206 = vmatpush.msra.mxu0 0.0
  %207 = vmatpush.msra.mxu0 0.0
  %208 = vmatpush.msra.mxu0 0.0
  %209 = vmatpush.msra.mxu0 0.0
  %210 = vmatpush.msra.mxu0 0.0
  %211 = vmatpush.msra.mxu0 %v27
  %212 = vmatpush.msra.mxu0 %v26
  %213 = vmatpush.msra.mxu0 %v25
  %214 = vmatpush.msra.mxu0 %v24
  %215 = vmatmul.f32.gmra.mxu0 %v197
  %v216 = vpop.f32.mrf.mxu0
  %v217 = vadd.f32 0.0, %v216
  %218 = vdwg.mxu0
  %v220 = vrot.slane %v217, 4
  %v222 = vadd.f32 %v55, %v220
  %v223 = vxor.u32 %v222, 2147483648
  %v224 = vmul.f32 %v223, 1.442695
  %v225 = vpow.pop %v224
  %v226 = vadd.f32 %v225, 1.0
  %v227 = vrcp.pop %v226
  %v228 = vmul.f32 %v226, %v227
  %v229 = vsub.f32 1.0, %v228
  %v230 = vmul.f32 %v227, %v229
  %v231 = vadd.f32 %v227, %v230
  %vm232 = vweird.f32 %v226
  %vm233 = vweird.f32 %v227
  %vm234 = vmor %vm232, %vm233
  %v235 = vsel %vm234, %v227, %v231
  %v236 = vand.u32 2147483647, %v226
  %vm237 = vcmp.eq.f32.partialorder %v236, 8.507059e+37
  %v238 = vand.u32 %v226, 2147483648
  %v239 = vor.u32 1.1754944e-38, %v238
  %v240 = vsel %vm237, %v239, %v235
  %v241 = vmul.f32 1.0, %v240
  %v242 = vmul.f32 %v241, 2.0
  %v243 = vsub.f32 %v242, 1.0
  %v245 = vrot.slane %v186, 6
  %v247 = vmul.f32 %v241, %v245
  %249 = vrot.lane.b32.xlu0 %v243, 64
  %v250 = vpop.permute.xlu0 %249
  %v252 = vmul.f32 %v241, %v250
  %254 = vrot.lane.b32.xlu0 %v252, 32
  %v255 = vpop.permute.xlu0 %254
  %v257 = vadd.f32 %v247, %v255
  %v258 = vtanh.pop %v257
  %260 = vrot.lane.b32.xlu0 %v258, 64
  %v261 = vpop.permute.xlu0 %260
  %v263 = vmul.f32 %v241, %v261
  %v265 = vrot.slane %v263, 4
  %266 = vrot.lane.b32.xlu0 %v265, 32
  %v267 = vpop.permute.xlu0 %266
  %v268 = vsel %vm60, %v267, 0
  %270 = vmatpush.msra.mxu0 0.0
  %271 = vmatpush.msra.mxu0 0.0
  %272 = vmatpush.msra.mxu0 0.0
  %273 = vmatpush.msra.mxu0 0.0
  %274 = vmatpush.msra.mxu0 0.0
  %275 = vmatpush.msra.mxu0 0.0
  %276 = vmatpush.msra.mxu0 0.0
  %277 = vmatpush.msra.mxu0 0.0
  %278 = vmatpush.msra.mxu0 0.0
  %279 = vmatpush.msra.mxu0 0.0
  %280 = vmatpush.msra.mxu0 0.0
  %281 = vmatpush.msra.mxu0 0.0
  %282 = vmatpush.msra.mxu0 %v27
  %283 = vmatpush.msra.mxu0 %v26
  %284 = vmatpush.msra.mxu0 %v25
  %285 = vmatpush.msra.mxu0 %v24
  %286 = vmatmul.f32.gmra.mxu0 %v268
  %v287 = vpop.f32.mrf.mxu0
  %v288 = vadd.f32 0.0, %v287
  %289 = vdwg.mxu0
  %v291 = vrot.slane %v288, 2
  %v293 = vadd.f32 %v55, %v291
  %v294 = vxor.u32 %v293, 2147483648
  %v295 = vmul.f32 %v294, 1.442695
  %v296 = vpow.pop %v295
  %v297 = vadd.f32 %v296, 1.0
  %v298 = vrcp.pop %v297
  %v299 = vmul.f32 %v297, %v298
  %v300 = vsub.f32 1.0, %v299
  %v301 = vmul.f32 %v298, %v300
  %v302 = vadd.f32 %v298, %v301
  %vm303 = vweird.f32 %v297
  %vm304 = vweird.f32 %v298
  %vm305 = vmor %vm303, %vm304
  %v306 = vsel %vm305, %v298, %v302
  %v307 = vand.u32 2147483647, %v297
  %vm308 = vcmp.eq.f32.partialorder %v307, 8.507059e+37
  %v309 = vand.u32 %v297, 2147483648
  %v310 = vor.u32 1.1754944e-38, %v309
  %v311 = vsel %vm308, %v310, %v306
  %v312 = vmul.f32 1.0, %v311
  %v313 = vmul.f32 %v312, 2.0
  %v314 = vsub.f32 %v313, 1.0
  %v316 = vrot.slane %v257, 6
  %v318 = vmul.f32 %v312, %v316
  %320 = vrot.lane.b32.xlu0 %v314, 64
  %v321 = vpop.permute.xlu0 %320
  %v323 = vmul.f32 %v312, %v321
  %325 = vrot.lane.b32.xlu0 %v323, 32
  %v326 = vpop.permute.xlu0 %325
  %v328 = vadd.f32 %v318, %v326
  %v329 = vtanh.pop %v328
  %331 = vrot.lane.b32.xlu0 %v329, 64
  %v332 = vpop.permute.xlu0 %331
  %v334 = vmul.f32 %v312, %v332
  %v336 = vrot.slane %v334, 6
  %337 = vrot.lane.b32.xlu0 %v336, 32
  %v338 = vpop.permute.xlu0 %337
  %v339 = vsel %vm60, %v338, 0
  %341 = vmatpush.msra.mxu0 0.0
  %342 = vmatpush.msra.mxu0 0.0
  %343 = vmatpush.msra.mxu0 0.0
  %344 = vmatpush.msra.mxu0 0.0
  %345 = vmatpush.msra.mxu0 0.0
  %346 = vmatpush.msra.mxu0 0.0
  %347 = vmatpush.msra.mxu0 0.0
  %348 = vmatpush.msra.mxu0 0.0
  %349 = vmatpush.msra.mxu0 0.0
  %350 = vmatpush.msra.mxu0 0.0
  %351 = vmatpush.msra.mxu0 0.0
  %352 = vmatpush.msra.mxu0 0.0
  %353 = vmatpush.msra.mxu0 %v27
  %354 = vmatpush.msra.mxu0 %v26
  %355 = vmatpush.msra.mxu0 %v25
  %356 = vmatpush.msra.mxu0 %v24
  %357 = vmatmul.f32.gmra.mxu0 %v339
  %v358 = vpop.f32.mrf.mxu0
  %v359 = vadd.f32 0.0, %v358
  %360 = vdwg.mxu0
  %v361 = vadd.f32 %v58, %v359
  %v362 = vxor.u32 %v361, 2147483648
  %v363 = vmul.f32 %v362, 1.442695
  %v364 = vpow.pop %v363
  %v365 = vadd.f32 %v364, 1.0
  %v366 = vrcp.pop %v365
  %v367 = vmul.f32 %v365, %v366
  %v368 = vsub.f32 1.0, %v367
  %v369 = vmul.f32 %v366, %v368
  %v370 = vadd.f32 %v366, %v369
  %vm371 = vweird.f32 %v365
  %vm372 = vweird.f32 %v366
  %vm373 = vmor %vm371, %vm372
  %v374 = vsel %vm373, %v366, %v370
  %v375 = vand.u32 2147483647, %v365
  %vm376 = vcmp.eq.f32.partialorder %v375, 8.507059e+37
  %v377 = vand.u32 %v365, 2147483648
  %v378 = vor.u32 1.1754944e-38, %v377
  %v379 = vsel %vm376, %v378, %v374
  %v380 = vmul.f32 1.0, %v379
  %v381 = vmul.f32 %v380, 2.0
  %v382 = vsub.f32 %v381, 1.0
  %v384 = vrot.slane %v328, 6
  %v386 = vmul.f32 %v380, %v384
  %388 = vrot.lane.b32.xlu0 %v382, 64
  %v389 = vpop.permute.xlu0 %388
  %v391 = vmul.f32 %v380, %v389
  %393 = vrot.lane.b32.xlu0 %v391, 32
  %v394 = vpop.permute.xlu0 %393
  %v396 = vadd.f32 %v386, %v394
  %v397 = vtanh.pop %v396
  %399 = vrot.lane.b32.xlu0 %v397, 64
  %v400 = vpop.permute.xlu0 %399
  %v402 = vmul.f32 %v380, %v400
  %404 = vrot.lane.b32.xlu0 %v402, 32
  %v405 = vpop.permute.xlu0 %404
  %v406 = vsel %vm60, %v405, 0
  %408 = vmatpush.msra.mxu0 0.0
  %409 = vmatpush.msra.mxu0 0.0
  %410 = vmatpush.msra.mxu0 0.0
  %411 = vmatpush.msra.mxu0 0.0
  %412 = vmatpush.msra.mxu0 0.0
  %413 = vmatpush.msra.mxu0 0.0
  %414 = vmatpush.msra.mxu0 0.0
  %415 = vmatpush.msra.mxu0 0.0
  %416 = vmatpush.msra.mxu0 0.0
  %417 = vmatpush.msra.mxu0 0.0
  %418 = vmatpush.msra.mxu0 0.0
  %419 = vmatpush.msra.mxu0 0.0
  %420 = vmatpush.msra.mxu0 %v27
  %421 = vmatpush.msra.mxu0 %v26
  %422 = vmatpush.msra.mxu0 %v25
  %423 = vmatpush.msra.mxu0 %v24
  %424 = vmatmul.f32.gmra.mxu0 %v406
  %v425 = vpop.f32.mrf.mxu0
  %v426 = vadd.f32 0.0, %v425
  %427 = vdwg.mxu0
  %v429 = vrot.slane %v426, 6
  %v431 = vadd.f32 %v58, %v429
  %v432 = vxor.u32 %v431, 2147483648
  %v433 = vmul.f32 %v432, 1.442695
  %v434 = vpow.pop %v433
  %v435 = vadd.f32 %v434, 1.0
  %v436 = vrcp.pop %v435
  %v437 = vmul.f32 %v435, %v436
  %v438 = vsub.f32 1.0, %v437
  %v439 = vmul.f32 %v436, %v438
  %v440 = vadd.f32 %v436, %v439
  %vm441 = vweird.f32 %v435
  %vm442 = vweird.f32 %v436
  %vm443 = vmor %vm441, %vm442
  %v444 = vsel %vm443, %v436, %v440
  %v445 = vand.u32 2147483647, %v435
  %vm446 = vcmp.eq.f32.partialorder %v445, 8.507059e+37
  %v447 = vand.u32 %v435, 2147483648
  %v448 = vor.u32 1.1754944e-38, %v447
  %v449 = vsel %vm446, %v448, %v444
  %v450 = vmul.f32 1.0, %v449
  %v451 = vmul.f32 %v450, 2.0
  %v452 = vsub.f32 %v451, 1.0
  %v454 = vrot.slane %v396, 6
  %v456 = vmul.f32 %v450, %v454
  %458 = vrot.lane.b32.xlu0 %v452, 64
  %v459 = vpop.permute.xlu0 %458
  %v461 = vmul.f32 %v450, %v459
  %463 = vrot.lane.b32.xlu0 %v461, 32
  %v464 = vpop.permute.xlu0 %463
  %v466 = vadd.f32 %v456, %v464
  %v467 = vtanh.pop %v466
  %469 = vrot.lane.b32.xlu0 %v467, 64
  %v470 = vpop.permute.xlu0 %469
  %v472 = vmul.f32 %v450, %v470
  %v474 = vrot.slane %v472, 2
  %475 = vrot.lane.b32.xlu0 %v474, 32
  %v476 = vpop.permute.xlu0 %475
  %v477 = vsel %vm60, %v476, 0
  %479 = vmatpush.msra.mxu0 0.0
  %480 = vmatpush.msra.mxu0 0.0
  %481 = vmatpush.msra.mxu0 0.0
  %482 = vmatpush.msra.mxu0 0.0
  %483 = vmatpush.msra.mxu0 0.0
  %484 = vmatpush.msra.mxu0 0.0
  %485 = vmatpush.msra.mxu0 0.0
  %486 = vmatpush.msra.mxu0 0.0
  %487 = vmatpush.msra.mxu0 0.0
  %488 = vmatpush.msra.mxu0 0.0
  %489 = vmatpush.msra.mxu0 0.0
  %490 = vmatpush.msra.mxu0 0.0
  %491 = vmatpush.msra.mxu0 %v27
  %492 = vmatpush.msra.mxu0 %v26
  %493 = vmatpush.msra.mxu0 %v25
  %494 = vmatpush.msra.mxu0 %v24
  %495 = vmatmul.f32.gmra.mxu0 %v477
  %v496 = vpop.f32.mrf.mxu0
  %v497 = vadd.f32 0.0, %v496
  %498 = vdwg.mxu0
  %v500 = vrot.slane %v497, 4
  %v502 = vadd.f32 %v58, %v500
  %v503 = vxor.u32 %v502, 2147483648
  %v504 = vmul.f32 %v503, 1.442695
  %v505 = vpow.pop %v504
  %v506 = vadd.f32 %v505, 1.0
  %v507 = vrcp.pop %v506
  %v508 = vmul.f32 %v506, %v507
  %v509 = vsub.f32 1.0, %v508
  %v510 = vmul.f32 %v507, %v509
  %v511 = vadd.f32 %v507, %v510
  %vm512 = vweird.f32 %v506
  %vm513 = vweird.f32 %v507
  %vm514 = vmor %vm512, %vm513
  %v515 = vsel %vm514, %v507, %v511
  %v516 = vand.u32 2147483647, %v506
  %vm517 = vcmp.eq.f32.partialorder %v516, 8.507059e+37
  %v518 = vand.u32 %v506, 2147483648
  %v519 = vor.u32 1.1754944e-38, %v518
  %v520 = vsel %vm517, %v519, %v515
  %v521 = vmul.f32 1.0, %v520
  %v522 = vmul.f32 %v521, 2.0
  %v523 = vsub.f32 %v522, 1.0
  %v525 = vrot.slane %v466, 6
  %v527 = vmul.f32 %v521, %v525
  %529 = vrot.lane.b32.xlu0 %v523, 64
  %v530 = vpop.permute.xlu0 %529
  %v532 = vmul.f32 %v521, %v530
  %534 = vrot.lane.b32.xlu0 %v532, 32
  %v535 = vpop.permute.xlu0 %534
  %v537 = vadd.f32 %v527, %v535
  %v538 = vtanh.pop %v537
  %540 = vrot.lane.b32.xlu0 %v538, 64
  %v541 = vpop.permute.xlu0 %540
  %v543 = vmul.f32 %v521, %v541
  %v545 = vrot.slane %v543, 4
  %546 = vrot.lane.b32.xlu0 %v545, 32
  %v547 = vpop.permute.xlu0 %546
  %v548 = vsel %vm60, %v547, 0
  %550 = vmatpush.msra.mxu0 0.0
  %551 = vmatpush.msra.mxu0 0.0
  %552 = vmatpush.msra.mxu0 0.0
  %553 = vmatpush.msra.mxu0 0.0
  %554 = vmatpush.msra.mxu0 0.0
  %555 = vmatpush.msra.mxu0 0.0
  %556 = vmatpush.msra.mxu0 0.0
  %557 = vmatpush.msra.mxu0 0.0
  %558 = vmatpush.msra.mxu0 0.0
  %559 = vmatpush.msra.mxu0 0.0
  %560 = vmatpush.msra.mxu0 0.0
  %561 = vmatpush.msra.mxu0 0.0
  %562 = vmatpush.msra.mxu0 %v27
  %563 = vmatpush.msra.mxu0 %v26
  %564 = vmatpush.msra.mxu0 %v25
  %565 = vmatpush.msra.mxu0 %v24
  %566 = vmatmul.f32.gmra.mxu0 %v548
  %v567 = vpop.f32.mrf.mxu0
  %v568 = vadd.f32 0.0, %v567
  %569 = vdwg.mxu0
  %v571 = vrot.slane %v568, 2
  %v573 = vadd.f32 %v58, %v571
  %v574 = vxor.u32 %v573, 2147483648
  %v575 = vmul.f32 %v574, 1.442695
  %v576 = vpow.pop %v575
  %v577 = vadd.f32 %v576, 1.0
  %v578 = vrcp.pop %v577
  %v579 = vmul.f32 %v577, %v578
  %v580 = vsub.f32 1.0, %v579
  %v581 = vmul.f32 %v578, %v580
  %v582 = vadd.f32 %v578, %v581
  %vm583 = vweird.f32 %v577
  %vm584 = vweird.f32 %v578
  %vm585 = vmor %vm583, %vm584
  %v586 = vsel %vm585, %v578, %v582
  %v587 = vand.u32 2147483647, %v577
  %vm588 = vcmp.eq.f32.partialorder %v587, 8.507059e+37
  %v589 = vand.u32 %v577, 2147483648
  %v590 = vor.u32 1.1754944e-38, %v589
  %v591 = vsel %vm588, %v590, %v586
  %v592 = vmul.f32 1.0, %v591
  %v593 = vmul.f32 %v592, 2.0
  %v594 = vsub.f32 %v593, 1.0
  %v596 = vrot.slane %v537, 6
  %v598 = vmul.f32 %v592, %v596
  %600 = vrot.lane.b32.xlu0 %v594, 64
  %v601 = vpop.permute.xlu0 %600
  %v603 = vmul.f32 %v592, %v601
  %605 = vrot.lane.b32.xlu0 %v603, 32
  %v606 = vpop.permute.xlu0 %605
  %v608 = vadd.f32 %v598, %v606
  %v609 = vtanh.pop %v608
  %611 = vrot.lane.b32.xlu0 %v609, 64
  %v612 = vpop.permute.xlu0 %611
  %v614 = vmul.f32 %v592, %v612
  %v615 = vld [vmem:[%s2] sm:$0xff]
  %v616 = vld [vmem:[%s2 + $0x8] sm:$0xff]
  %v617 = vld [vmem:[%s2 + $0x10] sm:$0xff]
  %v618 = vld [vmem:[%s2 + $0x18] sm:$0xff]
  %v619 = vld [vmem:[%s2 + $0x20] sm:$0xff]
  %v620 = vld [vmem:[%s2 + $0x28] sm:$0xff]
  %v621 = vld [vmem:[%s2 + $0x30] sm:$0xff]
  %v622 = vld [vmem:[%s2 + $0x38] sm:$0xff]
  %v624 = vperm.slane %v28, 1
  %v625 = vperm.slane %v28, 5
  %v628 = vperm.slane %v624, 1
  %v629 = vperm.slane %v625, 1
  %v631 = vrot.slane %v614, 6
  %632 = vrot.lane.b32.xlu0 %v631, 32
  %v633 = vpop.permute.xlu0 %632
  %v634 = vsel %vm60, %v633, 0
  %636 = vmatpush.msra.mxu0 0.0
  %637 = vmatpush.msra.mxu0 0.0
  %638 = vmatpush.msra.mxu0 0.0
  %639 = vmatpush.msra.mxu0 0.0
  %640 = vmatpush.msra.mxu0 0.0
  %641 = vmatpush.msra.mxu0 0.0
  %642 = vmatpush.msra.mxu0 0.0
  %643 = vmatpush.msra.mxu0 0.0
  %644 = vmatpush.msra.mxu0 0.0
  %645 = vmatpush.msra.mxu0 0.0
  %646 = vmatpush.msra.mxu0 0.0
  %647 = vmatpush.msra.mxu0 0.0
  %648 = vmatpush.msra.mxu0 %v621
  %649 = vmatpush.msra.mxu0 %v619
  %650 = vmatpush.msra.mxu0 %v617
  %651 = vmatpush.msra.mxu0 %v615
  %652 = vmatmul.f32.gmra.mxu0 %v634
  %v653 = vpop.f32.mrf.mxu0
  %v654 = vadd.f32 %v628, %v653
  %655 = vdwg.mxu0
  %656 = vmatpush.msra.mxu0 0.0
  %657 = vmatpush.msra.mxu0 0.0
  %658 = vmatpush.msra.mxu0 0.0
  %659 = vmatpush.msra.mxu0 0.0
  %660 = vmatpush.msra.mxu0 0.0
  %661 = vmatpush.msra.mxu0 0.0
  %662 = vmatpush.msra.mxu0 0.0
  %663 = vmatpush.msra.mxu0 0.0
  %664 = vmatpush.msra.mxu0 0.0
  %665 = vmatpush.msra.mxu0 0.0
  %666 = vmatpush.msra.mxu0 0.0
  %667 = vmatpush.msra.mxu0 0.0
  %668 = vmatpush.msra.mxu0 %v622
  %669 = vmatpush.msra.mxu0 %v620
  %670 = vmatpush.msra.mxu0 %v618
  %671 = vmatpush.msra.mxu0 %v616
  %672 = vmatmul.f32.gmra.mxu0 %v634
  %v673 = vpop.f32.mrf.mxu0
  %v674 = vadd.f32 %v629, %v673
  %675 = vdwg.mxu0
  %v676 = vmax.f32 %v654, 0.0
  %v677 = vmax.f32 %v674, 0.0
  %v678 = vld [vmem:[%s3] sm:$0xff]
  %v679 = vld [vmem:[%s3 + $0x8] sm:$0xff]
  %v680 = vld [vmem:[%s3 + $0x10] sm:$0xff]
  %v681 = vld [vmem:[%s3 + $0x18] sm:$0xff]
  %v682 = vld [vmem:[%s3 + $0x20] sm:$0xff]
  %v683 = vld [vmem:[%s3 + $0x28] sm:$0xff]
  %v684 = vld [vmem:[%s3 + $0x30] sm:$0xff]
  %v685 = vld [vmem:[%s3 + $0x38] sm:$0xff]
  %v686 = vld [vmem:[%s3 + $0x40] sm:$0xff]
  %v687 = vld [vmem:[%s3 + $0x48] sm:$0xff]
  %v688 = vld [vmem:[%s3 + $0x50] sm:$0xff]
  %v689 = vld [vmem:[%s3 + $0x58] sm:$0xff]
  %v690 = vld [vmem:[%s3 + $0x60] sm:$0xff]
  %v691 = vld [vmem:[%s3 + $0x68] sm:$0xff]
  %v692 = vld [vmem:[%s3 + $0x70] sm:$0xff]
  %v693 = vld [vmem:[%s3 + $0x78] sm:$0xff]
  %v694 = vld [vmem:[%s3 + $0x80] sm:$0xff]
  %v695 = vld [vmem:[%s3 + $0x88] sm:$0xff]
  %v696 = vld [vmem:[%s3 + $0x90] sm:$0xff]
  %v697 = vld [vmem:[%s3 + $0x98] sm:$0xff]
  %v698 = vld [vmem:[%s3 + $0xa0] sm:$0xff]
  %v699 = vld [vmem:[%s3 + $0xa8] sm:$0xff]
  %v700 = vld [vmem:[%s3 + $0xb0] sm:$0xff]
  %v701 = vld [vmem:[%s3 + $0xb8] sm:$0xff]
  %v702 = vperm.slane %v28, 2
  %vm703 = vcmask 523264
  %v705 = vsel %vm703, %v677, 0
  %707 = vmatpush.msra.mxu0 %v693
  %708 = vmatpush.msra.mxu0 %v692
  %709 = vmatpush.msra.mxu0 %v691
  %710 = vmatpush.msra.mxu0 %v690
  %711 = vmatpush.msra.mxu0 %v689
  %712 = vmatpush.msra.mxu0 %v688
  %713 = vmatpush.msra.mxu0 %v687
  %714 = vmatpush.msra.mxu0 %v686
  %715 = vmatpush.msra.mxu0 %v685
  %716 = vmatpush.msra.mxu0 %v684
  %717 = vmatpush.msra.mxu0 %v683
  %718 = vmatpush.msra.mxu0 %v682
  %719 = vmatpush.msra.mxu0 %v681
  %720 = vmatpush.msra.mxu0 %v680
  %721 = vmatpush.msra.mxu0 %v679
  %722 = vmatpush.msra.mxu0 %v678
  %723 = vmatmul.f32.gmra.mxu0 %v676
  %v724 = vpop.f32.mrf.mxu0
  %v725 = vadd.f32 %v702, %v724
  %726 = vdwg.mxu0
  %727 = vmatpush.msra.mxu0 0.0
  %728 = vmatpush.msra.mxu0 0.0
  %729 = vmatpush.msra.mxu0 0.0
  %730 = vmatpush.msra.mxu0 0.0
  %731 = vmatpush.msra.mxu0 0.0
  %732 = vmatpush.msra.mxu0 0.0
  %733 = vmatpush.msra.mxu0 0.0
  %734 = vmatpush.msra.mxu0 0.0
  %735 = vmatpush.msra.mxu0 %v701
  %736 = vmatpush.msra.mxu0 %v700
  %737 = vmatpush.msra.mxu0 %v699
  %738 = vmatpush.msra.mxu0 %v698
  %739 = vmatpush.msra.mxu0 %v697
  %740 = vmatpush.msra.mxu0 %v696
  %741 = vmatpush.msra.mxu0 %v695
  %742 = vmatpush.msra.mxu0 %v694
  %743 = vmatmul.f32.gmra.mxu0 %v705
  %v744 = vpop.f32.mrf.mxu0
  %v745 = vadd.f32 %v725, %v744
  %746 = vdwg.mxu0
  %v747 = vxor.u32 %v745, 2147483648
  %v748 = vmul.f32 %v747, 1.442695
  %v749 = vpow.pop %v748
  %v750 = vadd.f32 %v749, 1.0
  %v751 = vrcp.pop %v750
  %v752 = vmul.f32 %v750, %v751
  %v753 = vsub.f32 1.0, %v752
  %v754 = vmul.f32 %v751, %v753
  %v755 = vadd.f32 %v751, %v754
  %vm756 = vweird.f32 %v750
  %vm757 = vweird.f32 %v751
  %vm758 = vmor %vm756, %vm757
  %v759 = vsel %vm758, %v751, %v755
  %v760 = vand.u32 2147483647, %v750
  %vm761 = vcmp.eq.f32.partialorder %v760, 8.507059e+37
  %v762 = vand.u32 %v750, 2147483648
  %v763 = vor.u32 1.1754944e-38, %v762
  %v764 = vsel %vm761, %v763, %v759
  %v765 = vmul.f32 1.0, %v764
  %767 = vset.pattern.permute.xlu0 0
  %768 = vperm.xlu0 %767, %v745
  %v769 = vpop.permute.xlu0 %768
  %v771 = vadd.f32 %v769, %v745
  %772 = vrot.lane.b32.xlu0 %v745, 127
  %v773 = vpop.permute.xlu0 %772
  %vm775 = vcmask 25600
  %v776 = vsel %vm775, %v773, 0.0
  %777 = vadd.xlane.f32.xlu0 %v776
  %v778 = vpop.xlane.xlu0 %777
  %v779 = vrcp.pop 4.0
  %v780 = vmul.f32 4.0, %v779
  %v781 = vsub.f32 1.0, %v780
  %v782 = vmul.f32 %v779, %v781
  %v783 = vadd.f32 %v779, %v782
  %vm784 = vweird.f32 %v779
  %v785 = vsel %vm784, %v779, %v783
  %v786 = vmul.f32 %v778, %v785
  %v787 = vsub.f32 %v771, %v786
  %789 = vrot.lane.b32.xlu0 %v787, 127
  %v790 = vpop.permute.xlu0 %789
  %793 = vrot.lane.b32.xlu0 %v765, 127
  %v794 = vpop.permute.xlu0 %793
  %vm796 = vcmask 31744
  %v797 = vsel %vm796, %v790, %v794
  %vm798 = vcmask 58368
  %799 = vst.msk [vmem:[%s5] sm:$0x3] %vm798, %v797
  // Predicated region
  $region22: #{rainbow_lstm_dqn_forward.1} parent=0 // pred_check
    _
  $region23: #{rainbow_lstm_dqn_forward.1} parent=0 // pred_check_branch
    %801 = sbr.rel (0) target = $region25
  $region24: #{rainbow_lstm_dqn_forward.1} parent=0 // pred_region
    _
  $region25: #{rainbow_lstm_dqn_forward.1} parent=0 // pred_fallthru
    _
  // Predicated region
  $region26: #{rainbow_lstm_dqn_forward.1} parent=0 // pred_check
    _
  $region27: #{rainbow_lstm_dqn_forward.1} parent=0 // pred_check_branch
    %803 = sbr.rel (0) target = $region29
  $region28: #{rainbow_lstm_dqn_forward.1} parent=0 // pred_region
    _
  $region29: #{rainbow_lstm_dqn_forward.1} parent=0 // pred_fallthru
    _

</llo_original>
